<compile_context>
chip_gen: v7x
topology: tpu7x:2x2x1
jax: 0.10.0
libtpu: 0.0.40
codegen_flags: <defaults>
</compile_context>

<pallas_src>
import jax
import jax.numpy as jnp
from jax.experimental import pallas as pl
from jax.experimental.pallas import tpu as pltpu


# ----------------------------------------------------------------------------
# config stand-in for the (undefined-in-snippet) vehicleDynamic()
# ----------------------------------------------------------------------------
class vehicleDynamic:
    def __init__(self):
        self.refNum = 5  # number of reference points


HIDDEN = 256
NUM_HIDDEN = 4        # the four 256->256 hidden Linear layers (layers 2..5)
IN_PAD = 128          # input feature dim padded 23 -> 128 (aligned K tile)
OUT_PAD = 128         # output dim padded 2 -> 128 (lane-dense store)
DEG = jnp.pi / 180.0


# ----------------------------------------------------------------------------
# Pallas kernel: full 6-layer MLP forward, layer-pipelined over a grid axis.
#   grid = (n_batch_row_blocks, NUM_HIDDEN)
#   step (b, l):
#     l == 0             : h = ELU(x @ W1 + b1)
#     every l            : h = ELU(h @ W_hidden[l] + b[l+1])
#     l == NUM_HIDDEN-1  : out = tanh(h @ W6 + b6)   (W6 columns pre-swapped)
# Activations stay f32; operands are cast to bf16 only at the MXU input.
# ----------------------------------------------------------------------------
def actor_mlp_kernel(x_ref, w1_ref, wh_ref, w6_ref, b_ref, out_ref, h_ref):
    layer = pl.program_id(1)
    n_layers = pl.num_programs(1)

    def dense(h, w, b):
        return jnp.dot(h.astype(jnp.bfloat16), w,
                       preferred_element_type=jnp.float32) + b

    def elu(v):  # nn.ELU(alpha=1.0)
        return jnp.where(v > 0, v, jnp.exp(v) - 1.0)

    b_all = b_ref[...]                                   # (8, HIDDEN) f32

    @pl.when(layer == 0)
    def _():
        # layer 1: [TB, 128] @ [128, 256]
        h_ref[...] = elu(dense(x_ref[...], w1_ref[...], b_all[0:1, :]))

    # hidden layer (layer + 2): select its bias row without dynamic ref slicing
    rows = jax.lax.broadcasted_iota(jnp.int32, b_all.shape, 0)
    b_hidden = jnp.sum(jnp.where(rows == layer + 1, b_all, 0.0),
                       axis=0, keepdims=True)            # (1, HIDDEN)
    h_ref[...] = elu(dense(h_ref[...], wh_ref[0], b_hidden))

    @pl.when(layer == n_layers - 1)
    def _():
        # layer 6: [TB, 256] @ [256, 128]; columns already swapped in W6/b6
        out_ref[...] = jnp.tanh(dense(h_ref[...], w6_ref[...],
                                      b_all[5:6, :OUT_PAD]))


def run_actor_mlp(x, kp):
    """x: [B, input_size] f32 (already norm-multiplied); kp: prepped weights."""
    B, in_dim = x.shape
    if B <= 128:                               # one row block, sublane aligned
        B_pad = max(8, ((B + 7) // 8) * 8)
        TB = B_pad
    else:                                      # multiple 128-row blocks
        B_pad = ((B + 127) // 128) * 128
        TB = 128
    n_row_blocks = B_pad // TB

    x_pad = jnp.zeros((B_pad, IN_PAD), jnp.float32).at[:B, :in_dim].set(x)

    # Advisory cost estimate so XLA schedules the (latency-bound) call sanely.
    flops = 2 * B_pad * (IN_PAD * HIDDEN + NUM_HIDDEN * HIDDEN * HIDDEN
                         + HIDDEN * OUT_PAD)
    transcendentals = B_pad * ((NUM_HIDDEN + 1) * HIDDEN + OUT_PAD)
    bytes_accessed = int(kp["w1"].size * 2
                         + n_row_blocks * kp["wh"].size * 2
                         + kp["w6"].size * 2
                         + kp["b"].size * 4
                         + x_pad.size * 4 + B_pad * OUT_PAD * 4)

    grid_spec = pltpu.PrefetchScalarGridSpec(
        num_scalar_prefetch=0,
        grid=(n_row_blocks, NUM_HIDDEN),
        in_specs=[
            pl.BlockSpec((TB, IN_PAD), lambda b, l: (b, 0)),          # x
            pl.BlockSpec((IN_PAD, HIDDEN), lambda b, l: (0, 0)),      # W1
            pl.BlockSpec((1, HIDDEN, HIDDEN), lambda b, l: (l, 0, 0)),  # W2..W5
            pl.BlockSpec((HIDDEN, OUT_PAD), lambda b, l: (0, 0)),     # W6
            pl.BlockSpec((8, HIDDEN), lambda b, l: (0, 0)),           # biases
        ],
        out_specs=pl.BlockSpec((TB, OUT_PAD), lambda b, l: (b, 0)),
        scratch_shapes=[pltpu.VMEM((TB, HIDDEN), jnp.float32)],        # h carry
    )

    y = pl.pallas_call(
        actor_mlp_kernel,
        out_shape=jax.ShapeDtypeStruct((B_pad, OUT_PAD), jnp.float32),
        grid_spec=grid_spec,
        cost_estimate=pl.CostEstimate(flops=flops,
                                      transcendentals=transcendentals,
                                      bytes_accessed=bytes_accessed),
        compiler_params=pltpu.CompilerParams(
            dimension_semantics=("parallel", "arbitrary")),
    )(x_pad, kp["w1"], kp["wh"], kp["w6"], kp["b"])
    return y[:B, :2]


# ----------------------------------------------------------------------------
# Parameter construction (deterministic, xavier-normal like the module)
# ----------------------------------------------------------------------------
def init_params(key, input_size, output_size):
    sizes = [(input_size, HIDDEN)] + [(HIDDEN, HIDDEN)] * 4 + [(HIDDEN, output_size)]
    params = []
    for li, (fan_in, fan_out) in enumerate(sizes):
        key, sub = jax.random.split(key)
        std = jnp.sqrt(2.0 / (fan_in + fan_out))          # xavier_normal_
        w = jax.random.normal(sub, (fan_in, fan_out), jnp.float32) * std
        if li == len(sizes) - 1:                          # layers['10'].weight *= 1e-4
            w = w * 1e-4
        b = jnp.zeros((1, fan_out), jnp.float32)          # init.constant_(bias, 0.0)
        params.append((w, b))
    return params


def prepare_kernel_params(params, input_size):
    """Stack / pad / bf16-cast the six Linear layers into 4 kernel operands."""
    assert len(params) == 6
    (w1, b1) = params[0]
    mids = params[1:5]
    (w6, b6) = params[5]
    # Column-swap fold (result[:,0]=y[:,1]; result[:,1]=y[:,0]) is only valid
    # for outputSize == 2, which the module hardcodes (out_gain is length-2).
    assert w6.shape[1] == 2

    w1p = jnp.zeros((IN_PAD, HIDDEN), jnp.float32).at[:input_size, :].set(w1)
    wh = jnp.stack([w for (w, _) in mids], axis=0)                 # [4,256,256]
    w6_sw, b6_sw = w6[:, ::-1], b6[:, ::-1]                        # pre-swap
    w6p = jnp.zeros((HIDDEN, OUT_PAD), jnp.float32).at[:, :2].set(w6_sw)

    b_all = jnp.zeros((8, HIDDEN), jnp.float32)
    b_all = b_all.at[0, :].set(b1[0])
    for i, (_, b) in enumerate(mids):
        b_all = b_all.at[1 + i, :].set(b[0])
    b_all = b_all.at[5, :2].set(b6_sw[0])

    return dict(w1=w1p.astype(jnp.bfloat16),
                wh=wh.astype(jnp.bfloat16),
                w6=w6p.astype(jnp.bfloat16),
                b=b_all)


# ----------------------------------------------------------------------------
# ActorForIDC.preprocess — vectorized, batch-generic JAX glue.
# TODO(synk): fuse this [B, 30] trig/gather into the Pallas kernel (obs as a
# lane-padded VMEM row + iota masks) to remove the extra XLA fusion dispatch.
# ----------------------------------------------------------------------------
def preprocess(obs, ref_num):
    B = obs.shape[0]
    phi = obs[:, 5:6]                               # degrees
    phi_ref = obs[:, 5:6] - obs[:, 7:8]
    dref = obs[:, 6:7]
    x_sub_x_ref = -jnp.sin(phi_ref * DEG) * dref
    y_sub_y_ref = jnp.cos(phi_ref * DEG) * dref

    cos_phi = jnp.cos(phi * DEG)
    sin_phi = jnp.sin(phi * DEG)

    c3 = -x_sub_x_ref * cos_phi + -y_sub_y_ref * sin_phi
    # NOTE: reproduces the original expression verbatim (sin without deg conv).
    c4 = -x_sub_x_ref * (-jnp.sin(phi) * jnp.pi / 180.0) + -y_sub_y_ref * cos_phi
    c5 = jnp.cos(-obs[:, 7:8] * DEG)
    c6 = jnp.sin(-obs[:, 7:8] * DEG)

    obs_ego = jnp.concatenate([obs[:, 3:6], jnp.zeros((B, 1), obs.dtype)], axis=1)
    temp_state = obs[:, 10:10 + 4 * ref_num] - jnp.tile(obs_ego, (1, ref_num))
    ts = temp_state.reshape(B, ref_num, 4)[:, :ref_num - 1, :]
    dx, dy, dphi = ts[..., 0], ts[..., 1], ts[..., 2]

    rel0 = dx * cos_phi + dy * sin_phi
    rel1 = dx * -sin_phi + dy * cos_phi
    rel2 = jnp.cos(dphi * DEG)
    rel3 = jnp.sin(dphi * DEG)
    rel = jnp.stack([rel0, rel1, rel2, rel3], axis=-1).reshape(B, 4 * (ref_num - 1))

    return jnp.concatenate([obs[:, :3], c3, c4, c5, c6, rel], axis=1)


# Original scatter-based preprocess (kept as a correctness reference).
def _reference_preprocess(obs, input_size, ref_num):
    B = obs.shape[0]
    phi = obs[:, 5]
    phi_ref = obs[:, 5] - obs[:, 7]
    x_sub_x_ref = -jnp.sin(phi_ref * DEG) * obs[:, 6]
    y_sub_y_ref = jnp.cos(phi_ref * DEG) * obs[:, 6]

    obs_ego = jnp.concatenate([obs[:, 3:6], jnp.zeros((B, 1), obs.dtype)], axis=1)
    temp_state = obs[:, 10:10 + 4 * ref_num] - jnp.tile(obs_ego, (1, ref_num))

    x = jnp.zeros((B, input_size), jnp.float32)
    x = x.at[:, :3].set(obs[:, :3])
    x = x.at[:, 3].set(-x_sub_x_ref * jnp.cos(phi * DEG)
                       + -y_sub_y_ref * jnp.sin(phi * DEG))
    x = x.at[:, 4].set(-x_sub_x_ref * (-jnp.sin(phi) * jnp.pi / 180.0)
                       + -y_sub_y_ref * jnp.cos(phi * DEG))
    x = x.at[:, 5].set(jnp.cos(-obs[:, 7] * DEG))
    x = x.at[:, 6].set(jnp.sin(-obs[:, 7] * DEG))
    for i in range(1, ref_num):
        rel = 4 * i + 3
        ti = 4 * i - 4
        x = x.at[:, rel].set(temp_state[:, ti] * jnp.cos(phi * DEG)
                             + temp_state[:, ti + 1] * jnp.sin(phi * DEG))
        x = x.at[:, rel + 1].set(temp_state[:, ti] * -jnp.sin(phi * DEG)
                                 + temp_state[:, ti + 1] * jnp.cos(phi * DEG))
        x = x.at[:, rel + 2].set(jnp.cos(temp_state[:, ti + 2] * DEG))
        x = x.at[:, rel + 3].set(jnp.sin(temp_state[:, ti + 2] * DEG))
    return x


# ----------------------------------------------------------------------------
# Full ActorForIDC.forward (jitted).
# ----------------------------------------------------------------------------
def make_actor_for_idc(params, norm, input_size, ref_num):
    kp = prepare_kernel_params(params, input_size)

    @jax.jit
    def forward(obs):
        # f32 norm multiply *before* any bf16 cast == torch.mul(x, norm_matrix)
        x = preprocess(obs, ref_num) * norm
        return run_actor_mlp(x, kp)           # columns already swapped in W6
    return forward


# pure-JAX reference mirroring the original module math; weights/activations
# rounded to bf16 exactly where the kernel rounds them (apples-to-apples).
def _reference_forward(obs, params, norm, out_gain, input_size, ref_num):
    h = _reference_preprocess(obs, input_size, ref_num) * norm
    for i, (w, b) in enumerate(params):
        w = w.astype(jnp.bfloat16).astype(jnp.float32)
        h = h.astype(jnp.bfloat16).astype(jnp.float32) @ w + b
        if i < len(params) - 1:
            h = jnp.where(h > 0, h, jnp.exp(h) - 1.0)
        else:
            h = jnp.tanh(h)
    y = (h * out_gain) / out_gain            # cancels exactly (out_gain != 0)
    return y[:, ::-1]


if __name__ == "__main__":
    cfg = vehicleDynamic()
    ref_num = cfg.refNum
    input_size = 3 + 4 * ref_num          # 23
    output_size = 2
    obs_size = 10 + 4 * ref_num           # 30

    key = jax.random.PRNGKey(0)
    key, k_obs, k_batch = jax.random.split(key, 3)

    obs = jax.random.normal(k_obs, (1, obs_size), jnp.float32)
    obs_batch = jax.random.normal(k_batch, (8, obs_size), jnp.float32)

    params = init_params(key, input_size, output_size)
    norm = jnp.ones((1, input_size), jnp.float32)                  # _norm_matrix
    out_gain = jnp.asarray([[2.0, 0.3]], jnp.float32)              # _out_gain

    # Sanity: vectorized preprocess == original scatter preprocess.
    xp = preprocess(obs_batch, ref_num)
    xr = _reference_preprocess(obs_batch, input_size, ref_num)
    assert jnp.allclose(xp, xr, atol=1e-6, rtol=1e-6)

    forward = make_actor_for_idc(params, norm, input_size, ref_num)

    # B = 1 (module semantics)
    result = jax.block_until_ready(forward(obs))
    ref = _reference_forward(obs, params, norm, out_gain, input_size, ref_num)
    assert result.shape == (1, output_size)
    assert jnp.allclose(result, ref, atol=1e-5, rtol=1e-3), (result, ref)

    # Batched rollout rows (review: amortize per-call latency over many envs)
    result_b = jax.block_until_ready(forward(obs_batch))
    ref_b = _reference_forward(obs_batch, params, norm, out_gain,
                               input_size, ref_num)
    assert result_b.shape == (8, output_size)
    assert jnp.allclose(result_b, ref_b, atol=1e-5, rtol=1e-3), (result_b, ref_b)

    print("KERNEL_OK")
</pallas_src>

<mosaic_0001>
module attributes {stable_mosaic.version = 11 : i64} {
  func.func @actor_mlp_kernel(%arg0: i32, %arg1: i32, %arg2: memref<8x128xf32, #tpu.memory_space<vmem>>, %arg3: memref<128x256xbf16, #tpu.memory_space<vmem>>, %arg4: memref<1x256x256xbf16, #tpu.memory_space<vmem>>, %arg5: memref<256x128xbf16, #tpu.memory_space<vmem>>, %arg6: memref<8x256xf32, #tpu.memory_space<vmem>>, %arg7: memref<8x128xf32, #tpu.memory_space<vmem>>, %arg8: memref<8x256xf32, #tpu.memory_space<vmem>>) attributes {dimension_semantics = [#tpu.dimension_semantics<parallel>, #tpu.dimension_semantics<arbitrary>], iteration_bounds = array<i64: 1, 4>, scalar_prefetch = 0 : i64, scratch_operands = 1 : i64, tpu.core_type = #tpu.core_type<tc>, window_params = [{transform_indices = @transform_0, window_bounds = array<i64: 8, 128>}, {pipeline_mode = #tpu.pipeline_mode<synchronous>, transform_indices = @transform_1, window_bounds = array<i64: 128, 256>}, {transform_indices = @transform_2, window_bounds = array<i64: 1, 256, 256>}, {pipeline_mode = #tpu.pipeline_mode<synchronous>, transform_indices = @transform_3, window_bounds = array<i64: 256, 128>}, {pipeline_mode = #tpu.pipeline_mode<synchronous>, transform_indices = @transform_4, window_bounds = array<i64: 8, 256>}, {transform_indices = @transform_5, window_bounds = array<i64: 8, 128>}]} {
    %c0 = arith.constant 0 : index
    %c0_0 = arith.constant 0 : index
    %0 = vector.load %arg6[%c0, %c0_0] : memref<8x256xf32, #tpu.memory_space<vmem>>, vector<8x256xf32>
    %c0_i32 = arith.constant 0 : i32
    %1 = arith.cmpi eq, %arg1, %c0_i32 : i32
    %2 = arith.extui %1 : i1 to i32
    %c0_i32_1 = arith.constant 0 : i32
    %3 = arith.cmpi ne, %2, %c0_i32_1 : i32
    scf.if %3 {
      %c0_14 = arith.constant 0 : index
      %c0_15 = arith.constant 0 : index
      %29 = vector.load %arg2[%c0_14, %c0_15] : memref<8x128xf32, #tpu.memory_space<vmem>>, vector<8x128xf32>
      %c0_16 = arith.constant 0 : index
      %c0_17 = arith.constant 0 : index
      %30 = vector.load %arg3[%c0_16, %c0_17] : memref<128x256xbf16, #tpu.memory_space<vmem>>, vector<128x256xbf16>
      %31 = vector.extract_strided_slice %0 {offsets = [0, 0], sizes = [1, 256], strides = [1, 1]} : vector<8x256xf32> to vector<1x256xf32>
      %32 = arith.truncf %29 : vector<8x128xf32> to vector<8x128xbf16>
      %cst_18 = arith.constant dense<0.000000e+00> : vector<8x256xf32>
      %33 = tpu.matmul %32, %30, %cst_18 {dimension_numbers = #tpu.dot_dimension_numbers<[1], [0], [0], [1], [0, 0, 1, 1], [], []>} : vector<8x128xbf16>, vector<128x256xbf16>, vector<8x256xf32> -> vector<8x256xf32>
      %34 = vector.broadcast %31 : vector<1x256xf32> to vector<8x256xf32>
      %35 = arith.addf %33, %34 : vector<8x256xf32>
      %cst_19 = arith.constant 0.000000e+00 : f32
      %36 = vector.broadcast %cst_19 : f32 to vector<8x256xf32>
      %37 = arith.cmpf ogt, %35, %36 : vector<8x256xf32>
      %38 = math.exp %35 : vector<8x256xf32>
      %cst_20 = arith.constant 1.000000e+00 : f32
      %39 = vector.broadcast %cst_20 : f32 to vector<8x256xf32>
      %40 = arith.subf %38, %39 : vector<8x256xf32>
      %41 = arith.select %37, %35, %40 : vector<8x256xi1>, vector<8x256xf32>
      %c0_21 = arith.constant 0 : index
      %c0_22 = arith.constant 0 : index
      %42 = vector.load %arg8[%c0_21, %c0_22] : memref<8x256xf32, #tpu.memory_space<vmem>>, vector<8x256xf32>
      tpu.vector_store %arg8[%c0_21, %c0_22], %41 {strides = array<i32>} : memref<8x256xf32, #tpu.memory_space<vmem>>, vector<8x256xf32>,
    } else {
    }
    %4 = tpu.iota {dimensions = array<i32: 0>} : vector<8x256xi32>
    %c1_i32 = arith.constant 1 : i32
    %5 = arith.addi %arg1, %c1_i32 : i32
    %6 = vector.broadcast %5 : i32 to vector<8x256xi32>
    %7 = arith.cmpi eq, %4, %6 : vector<8x256xi32>
    %cst = arith.constant 0.000000e+00 : f32
    %8 = vector.broadcast %cst : f32 to vector<8x256xf32>
    %9 = arith.select %7, %0, %8 : vector<8x256xi1>, vector<8x256xf32>
    %cst_2 = arith.constant dense<0.000000e+00> : vector<256xf32>
    %10 = vector.multi_reduction <add>, %9, %cst_2 [0] : vector<8x256xf32> to vector<256xf32>
    %11 = vector.shape_cast %10 : vector<256xf32> to vector<1x256xf32>
    %c0_3 = arith.constant 0 : index
    %c0_4 = arith.constant 0 : index
    %12 = vector.load %arg8[%c0_3, %c0_4] : memref<8x256xf32, #tpu.memory_space<vmem>>, vector<8x256xf32>
    %c0_5 = arith.constant 0 : index
    %c0_6 = arith.constant 0 : index
    %c0_7 = arith.constant 0 : index
    %13 = vector.load %arg4[%c0_5, %c0_6, %c0_7] : memref<1x256x256xbf16, #tpu.memory_space<vmem>>, vector<1x256x256xbf16>
    %14 = vector.shape_cast %13 : vector<1x256x256xbf16> to vector<256x256xbf16>
    %15 = arith.truncf %12 : vector<8x256xf32> to vector<8x256xbf16>
    %cst_8 = arith.constant dense<0.000000e+00> : vector<8x256xf32>
    %16 = tpu.matmul %15, %14, %cst_8 {dimension_numbers = #tpu.dot_dimension_numbers<[1], [0], [0], [1], [0, 0, 1, 1], [], []>} : vector<8x256xbf16>, vector<256x256xbf16>, vector<8x256xf32> -> vector<8x256xf32>
    %17 = vector.broadcast %11 : vector<1x256xf32> to vector<8x256xf32>
    %18 = arith.addf %16, %17 : vector<8x256xf32>
    %cst_9 = arith.constant 0.000000e+00 : f32
    %19 = vector.broadcast %cst_9 : f32 to vector<8x256xf32>
    %20 = arith.cmpf ogt, %18, %19 : vector<8x256xf32>
    %21 = math.exp %18 : vector<8x256xf32>
    %cst_10 = arith.constant 1.000000e+00 : f32
    %22 = vector.broadcast %cst_10 : f32 to vector<8x256xf32>
    %23 = arith.subf %21, %22 : vector<8x256xf32>
    %24 = arith.select %20, %18, %23 : vector<8x256xi1>, vector<8x256xf32>
    %c0_11 = arith.constant 0 : index
    %c0_12 = arith.constant 0 : index
    %25 = vector.load %arg8[%c0_11, %c0_12] : memref<8x256xf32, #tpu.memory_space<vmem>>, vector<8x256xf32>
    tpu.vector_store %arg8[%c0_11, %c0_12], %24 {strides = array<i32>} : memref<8x256xf32, #tpu.memory_space<vmem>>, vector<8x256xf32>,
    %c3_i32 = arith.constant 3 : i32
    %26 = arith.cmpi eq, %arg1, %c3_i32 : i32
    %27 = arith.extui %26 : i1 to i32
    %c0_i32_13 = arith.constant 0 : i32
    %28 = arith.cmpi ne, %27, %c0_i32_13 : i32
    scf.if %28 {
      %c0_14 = arith.constant 0 : index
      %c0_15 = arith.constant 0 : index
      %29 = vector.load %arg8[%c0_14, %c0_15] : memref<8x256xf32, #tpu.memory_space<vmem>>, vector<8x256xf32>
      %c0_16 = arith.constant 0 : index
      %c0_17 = arith.constant 0 : index
      %30 = vector.load %arg5[%c0_16, %c0_17] : memref<256x128xbf16, #tpu.memory_space<vmem>>, vector<256x128xbf16>
      %31 = vector.extract_strided_slice %0 {offsets = [5, 0], sizes = [1, 128], strides = [1, 1]} : vector<8x256xf32> to vector<1x128xf32>
      %32 = arith.truncf %29 : vector<8x256xf32> to vector<8x256xbf16>
      %cst_18 = arith.constant dense<0.000000e+00> : vector<8x128xf32>
      %33 = tpu.matmul %32, %30, %cst_18 {dimension_numbers = #tpu.dot_dimension_numbers<[1], [0], [0], [1], [0, 0, 1, 1], [], []>} : vector<8x256xbf16>, vector<256x128xbf16>, vector<8x128xf32> -> vector<8x128xf32>
      %34 = vector.broadcast %31 : vector<1x128xf32> to vector<8x128xf32>
      %35 = arith.addf %33, %34 : vector<8x128xf32>
      %36 = math.tanh %35 : vector<8x128xf32>
      %c0_19 = arith.constant 0 : index
      %c0_20 = arith.constant 0 : index
      %37 = vector.load %arg7[%c0_19, %c0_20] : memref<8x128xf32, #tpu.memory_space<vmem>>, vector<8x128xf32>
      tpu.vector_store %arg7[%c0_19, %c0_20], %36 {strides = array<i32>} : memref<8x128xf32, #tpu.memory_space<vmem>>, vector<8x128xf32>,
    } else {
    }
    return
  }
  func.func @transform_0(%arg0: i32, %arg1: i32) -> (i32, i32) {
    %c0_i32 = arith.constant 0 : i32
    %c0_i32_0 = arith.constant 0 : i32
    return %arg0, %c0_i32 : i32, i32
  }
  func.func @transform_1(%arg0: i32, %arg1: i32) -> (i32, i32) {
    %c0_i32 = arith.constant 0 : i32
    %c0_i32_0 = arith.constant 0 : i32
    %c0_i32_1 = arith.constant 0 : i32
    return %c0_i32, %c0_i32_0 : i32, i32
  }
  func.func @transform_2(%arg0: i32, %arg1: i32) -> (i32, i32, i32) {
    %c0_i32 = arith.constant 0 : i32
    %c0_i32_0 = arith.constant 0 : i32
    %c0_i32_1 = arith.constant 0 : i32
    return %arg1, %c0_i32, %c0_i32_0 : i32, i32, i32
  }
  func.func @transform_3(%arg0: i32, %arg1: i32) -> (i32, i32) {
    %c0_i32 = arith.constant 0 : i32
    %c0_i32_0 = arith.constant 0 : i32
    %c0_i32_1 = arith.constant 0 : i32
    return %c0_i32, %c0_i32_0 : i32, i32
  }
  func.func @transform_4(%arg0: i32, %arg1: i32) -> (i32, i32) {
    %c0_i32 = arith.constant 0 : i32
    %c0_i32_0 = arith.constant 0 : i32
    %c0_i32_1 = arith.constant 0 : i32
    return %c0_i32, %c0_i32_0 : i32, i32
  }
  func.func @transform_5(%arg0: i32, %arg1: i32) -> (i32, i32) {
    %c0_i32 = arith.constant 0 : i32
    %c0_i32_0 = arith.constant 0 : i32
    return %arg0, %c0_i32 : i32, i32
  }
}

</mosaic_0001>

<llo_original>
// kernel: forward.1
$region0: #{forward.1}
  #allocation0 [shape = 'u32[]', space=smem, size = 0x4, offset = 0x4, fixed_abs, tag = 'smem constant byte address 0x4 - core index']
  #allocation1 [shape = 'u32[144,128]{1,0:T(1,128)}', space=vmem, size = 0x12000, scoped, tag = 'internal scratch']
  #allocation2 [shape = 'f32[8,256]{1,0:T(8,128)}', space=vmem, size = 0x2000, scoped, tag = 'scratch operand']
  %s0 = inlined_call_operand.vmem [shape: f32[8,128], index: 0, kind: input, shape index: {}]
  %s1 = inlined_call_operand.vmem [shape: bf16[128,256], index: 1, kind: input, shape index: {}]
  %s2 = inlined_call_operand.vmem [shape: bf16[4,256,256], index: 2, kind: input, shape index: {}]
  %s3 = inlined_call_operand.vmem [shape: bf16[256,128], index: 3, kind: input, shape index: {}]
  %s4 = inlined_call_operand.vmem [shape: f32[8,256], index: 4, kind: input, shape index: {}]
  %s5 = inlined_call_operand.vmem [shape: f32[8,128], index: 5, kind: output, shape index: {}]
  %s6 = sld [smem:[#allocation0]]
  $region61: #{forward.1} parent=0
    _
  %s8 = ssub.s32 1, %s6
  %s9 = scalar_select 0, %s8, %s6
  loop: start=0, step=1, limit=6
  $region2: #{forward.1} parent=0 // loop_pre_header
    _
  $region3: #{forward.1} parent=0 // loop_header
    %s11 = sphi 0, %s15
    %p12 = scmp.ge.s32.totalorder %s11, 6
    %s18 = sphi 0, %s30
    %s19 = sphi 0, %s26
    %s20 = sphi 0, %s18
    %s21 = sphi 0, %s19
    %s22 = sphi 0, %s20
    %s23 = sphi 0, %s21
    %s33 = sphi 0, %s35
    %s36 = sphi 0, %s33
    %s37 = sphi 0, %s36
    %s53 = sphi 0, %s37
    %s57 = sphi 0, %s57
    %s59 = sphi 0, %s57
    %s60 = sphi 0, %s59
    %s74 = sphi 0, %s60
    %s80 = sphi 0, %s82
    %s83 = sphi 0, %s80
    %s84 = sphi 0, %s83
    %s100 = sphi 0, %s84
    %s104 = sphi 0, %s104
    %s106 = sphi 0, %s104
    %s107 = sphi 0, %s106
    %s121 = sphi 0, %s107
    %s125 = sphi 0, %s125
    %s127 = sphi 0, %s125
    %s128 = sphi 0, %s127
    %s142 = sphi 0, %s128
    %s148 = sphi 0, %s150
    %s151 = sphi 0, %s148
    %s152 = sphi 0, %s151
    %s168 = sphi 0, %s152
  $region4: #{forward.1} parent=0 // loop_header_branch
    %14 = sbr.rel (%p12) target = $region8
  $region5: #{forward.1} parent=0 // loop_body
    %s16 = ssub.s32 %s11, 1
    %s17 = ssub.s32 %s11, 2
    %s24 = sadd.s32 1, %s19
    %p25 = scmp.ge.s32.totalorder %s24, 4
    %s26 = scalar_select %p25, 0, %s24
    %s27 = sadd.s32 1, %s18
    %s28 = scalar_select %p25, %s27, %s18
    %p29 = scmp.ge.s32.totalorder %s28, 1
    %s30 = scalar_select %p29, 0, %s28
    %s31 = ssub.s32 %s18, %s30
    %p32 = scmp.eq.s32.totalorder %s31, 0
    %s34 = sadd.s32 %s33, 1
    %s35 = scalar_select %p32, %s33, %s34
    %p38 = pneg %p32
    %p39 = scmp.eq.s32.totalorder %s11, 3
    %p40 = por %p38, %p39
    %p41 = scmp.ne.s32.totalorder %s33, %s36
    %p42 = scmp.eq.s32.totalorder %s11, 0
    %p43 = por %p41, %p42
    %p44 = scmp.ne.s32.totalorder %s33, %s36
    %p45 = scmp.eq.s32.totalorder %s16, 3
    %p46 = por %p44, %p45
    %p47 = scmp.ne.s32.totalorder %s36, %s37
    %p48 = scmp.eq.s32.totalorder %s16, 0
    %p49 = por %p47, %p48
    %p50 = scmp.ne.s32.totalorder %s36, %s37
    %p51 = scmp.eq.s32.totalorder %s17, 3
    %p52 = por %p50, %p51
    %p54 = scmp.ne.s32.totalorder %s37, %s53
    %p55 = scmp.eq.s32.totalorder %s17, 0
    %p56 = por %p54, %p55
    %s58 = sadd.s32 %s57, 1
    %p61 = scmp.eq.s32.totalorder %s11, 3
    %p62 = scmp.ne.s32.totalorder %s57, %s59
    %p63 = scmp.eq.s32.totalorder %s11, 0
    %p64 = por %p62, %p63
    %p65 = scmp.ne.s32.totalorder %s57, %s59
    %p66 = scmp.eq.s32.totalorder %s16, 3
    %p67 = por %p65, %p66
    %p68 = scmp.ne.s32.totalorder %s59, %s60
    %p69 = scmp.eq.s32.totalorder %s16, 0
    %p70 = por %p68, %p69
    %p71 = scmp.ne.s32.totalorder %s59, %s60
    %p72 = scmp.eq.s32.totalorder %s17, 3
    %p73 = por %p71, %p72
    %p75 = scmp.ne.s32.totalorder %s60, %s74
    %p76 = scmp.eq.s32.totalorder %s17, 0
    %p77 = por %p75, %p76
    %s78 = ssub.s32 %s19, %s26
    %p79 = scmp.eq.s32.totalorder %s78, 0
    %s81 = sadd.s32 %s80, 1
    %s82 = scalar_select %p79, %s80, %s81
    %p85 = pneg %p79
    %p86 = scmp.eq.s32.totalorder %s11, 3
    %p87 = por %p85, %p86
    %p88 = scmp.ne.s32.totalorder %s80, %s83
    %p89 = scmp.eq.s32.totalorder %s11, 0
    %p90 = por %p88, %p89
    %p91 = scmp.ne.s32.totalorder %s80, %s83
    %p92 = scmp.eq.s32.totalorder %s16, 3
    %p93 = por %p91, %p92
    %p94 = scmp.ne.s32.totalorder %s83, %s84
    %p95 = scmp.eq.s32.totalorder %s16, 0
    %p96 = por %p94, %p95
    %p97 = scmp.ne.s32.totalorder %s83, %s84
    %p98 = scmp.eq.s32.totalorder %s17, 3
    %p99 = por %p97, %p98
    %p101 = scmp.ne.s32.totalorder %s84, %s100
    %p102 = scmp.eq.s32.totalorder %s17, 0
    %p103 = por %p101, %p102
    %s105 = sadd.s32 %s104, 1
    %p108 = scmp.eq.s32.totalorder %s11, 3
    %p109 = scmp.ne.s32.totalorder %s104, %s106
    %p110 = scmp.eq.s32.totalorder %s11, 0
    %p111 = por %p109, %p110
    %p112 = scmp.ne.s32.totalorder %s104, %s106
    %p113 = scmp.eq.s32.totalorder %s16, 3
    %p114 = por %p112, %p113
    %p115 = scmp.ne.s32.totalorder %s106, %s107
    %p116 = scmp.eq.s32.totalorder %s16, 0
    %p117 = por %p115, %p116
    %p118 = scmp.ne.s32.totalorder %s106, %s107
    %p119 = scmp.eq.s32.totalorder %s17, 3
    %p120 = por %p118, %p119
    %p122 = scmp.ne.s32.totalorder %s107, %s121
    %p123 = scmp.eq.s32.totalorder %s17, 0
    %p124 = por %p122, %p123
    %s126 = sadd.s32 %s125, 1
    %p129 = scmp.eq.s32.totalorder %s11, 3
    %p130 = scmp.ne.s32.totalorder %s125, %s127
    %p131 = scmp.eq.s32.totalorder %s11, 0
    %p132 = por %p130, %p131
    %p133 = scmp.ne.s32.totalorder %s125, %s127
    %p134 = scmp.eq.s32.totalorder %s16, 3
    %p135 = por %p133, %p134
    %p136 = scmp.ne.s32.totalorder %s127, %s128
    %p137 = scmp.eq.s32.totalorder %s16, 0
    %p138 = por %p136, %p137
    %p139 = scmp.ne.s32.totalorder %s127, %s128
    %p140 = scmp.eq.s32.totalorder %s17, 3
    %p141 = por %p139, %p140
    %p143 = scmp.ne.s32.totalorder %s128, %s142
    %p144 = scmp.eq.s32.totalorder %s17, 0
    %p145 = por %p143, %p144
    %s146 = ssub.s32 %s18, %s30
    %p147 = scmp.eq.s32.totalorder %s146, 0
    %s149 = sadd.s32 %s148, 1
    %s150 = scalar_select %p147, %s148, %s149
    %p153 = pneg %p147
    %p154 = scmp.eq.s32.totalorder %s11, 3
    %p155 = por %p153, %p154
    %p156 = scmp.ne.s32.totalorder %s148, %s151
    %p157 = scmp.eq.s32.totalorder %s11, 0
    %p158 = por %p156, %p157
    %p159 = scmp.ne.s32.totalorder %s148, %s151
    %p160 = scmp.eq.s32.totalorder %s16, 3
    %p161 = por %p159, %p160
    %p162 = scmp.ne.s32.totalorder %s151, %s152
    %p163 = scmp.eq.s32.totalorder %s16, 0
    %p164 = por %p162, %p163
    %p165 = scmp.ne.s32.totalorder %s151, %s152
    %p166 = scmp.eq.s32.totalorder %s17, 3
    %p167 = por %p165, %p166
    %p169 = scmp.ne.s32.totalorder %s152, %s168
    %p170 = scmp.eq.s32.totalorder %s17, 0
    %p171 = por %p169, %p170
    %p172 = scmp.le.s32.totalorder 1, %s11
    %p173 = scmp.lt.s32.totalorder %s11, 5
    %p174 = pnand %p172, %p173
    %p175 = pneg %p174
    // Predicated region
    $region9: #{forward.1} parent=5 // pred_check
      _
    $region10: #{forward.1} parent=5 // pred_check_branch
      %177 = sbr.rel (%p174) target = $region12
    $region11: #{forward.1} parent=5 // pred_region
      %s178 = ssub.s32 %s11, 1
      // Predicated region
      $region13: #{forward.1} parent=11 // pred_check
        %p179 = pneg %p49
      $region14: #{forward.1} parent=11 // pred_check_branch
        %181 = sbr.rel (%p179) target = $region16
      $region15: #{forward.1} parent=11 // pred_region
        %p182 = scmp.lt.s32.totalorder %s20, 0
        %s183 = scalar_select %p182, %s20, 0
        %s184 = smul.addr %s183, 8
        %s185 = scalar_lea.vmem %s0, %s184
      $region16: #{forward.1} parent=11 // pred_fallthru
        _
      // Predicated region
      $region17: #{forward.1} parent=11 // pred_check
        %p186 = pneg %p70
      $region18: #{forward.1} parent=11 // pred_check_branch
        %188 = sbr.rel (%p186) target = $region20
      $region19: #{forward.1} parent=11 // pred_region
        _
      $region20: #{forward.1} parent=11 // pred_fallthru
        _
      // Predicated region
      $region21: #{forward.1} parent=11 // pred_check
        %p189 = pneg %p117
      $region22: #{forward.1} parent=11 // pred_check_branch
        %191 = sbr.rel (%p189) target = $region24
      $region23: #{forward.1} parent=11 // pred_region
        _
      $region24: #{forward.1} parent=11 // pred_fallthru
        _
      // Predicated region
      $region25: #{forward.1} parent=11 // pred_check
        %p192 = pneg %p138
      $region26: #{forward.1} parent=11 // pred_check_branch
        %194 = sbr.rel (%p192) target = $region28
      $region27: #{forward.1} parent=11 // pred_region
        _
      $region28: #{forward.1} parent=11 // pred_fallthru
        _
    $region12: #{forward.1} parent=5 // pred_fallthru
      _
    %p195 = scmp.lt.s32.totalorder %s11, 4
    // Predicated region
    $region29: #{forward.1} parent=5 // pred_check
      %p196 = pneg %p195
    $region30: #{forward.1} parent=5 // pred_check_branch
      %198 = sbr.rel (%p196) target = $region32
    $region31: #{forward.1} parent=5 // pred_region
      // Predicated region
      $region33: #{forward.1} parent=31 // pred_check
        %p199 = pneg %p90
      $region34: #{forward.1} parent=31 // pred_check_branch
        %201 = sbr.rel (%p199) target = $region36
      $region35: #{forward.1} parent=31 // pred_region
        %p202 = scmp.lt.s32.totalorder %s19, 3
        %s203 = scalar_select %p202, %s19, 3
        %s204 = smul.addr %s203, 64
        %s205 = smul.addr %s204, 4
        %s206 = scalar_lea.vmem %s2, %s205
      $region36: #{forward.1} parent=31 // pred_fallthru
        _
    $region32: #{forward.1} parent=5 // pred_fallthru
      _
    %p207 = scmp.le.s32.totalorder 1, %s11
    %p208 = scmp.lt.s32.totalorder %s11, 5
    %p209 = pnand %p207, %p208
    %p210 = pneg %p209
    // Predicated region
    $region37: #{forward.1} parent=5 // pred_check
      _
    $region38: #{forward.1} parent=5 // pred_check_branch
      %212 = sbr.rel (%p209) target = $region40
    $region39: #{forward.1} parent=5 // pred_region
      %s213 = ssub.s32 %s11, 1
      %p214 = scmp.lt.s32.totalorder %s20, 0
      %s215 = scalar_select %p214, %s20, 0
      %s216 = smul.addr %s215, 8
      %s217 = scalar_lea.vmem %s0, %s216
      %p218 = pneg %p49
      %p219 = pneg %p46
      %p220 = pneg %p70
      %p221 = pneg %p67
      %p222 = scmp.lt.s32.totalorder %s21, 3
      %s223 = scalar_select %p222, %s21, 3
      %s224 = smul.addr %s223, 64
      %s225 = smul.addr %s224, 4
      %s226 = scalar_lea.vmem %s2, %s225
      %p227 = pneg %p96
      %p228 = pneg %p93
      %p229 = pneg %p117
      %p230 = pneg %p114
      %p231 = pneg %p138
      %p232 = pneg %p135
      %p233 = pneg %p164
      %p234 = pneg %p161
      %p235 = scmp.lt.s32.totalorder %s20, 0
      %s236 = scalar_select %p235, %s20, 0
      %s237 = smul.addr %s236, 8
      %s238 = scalar_lea.vmem %s5, %s237
      %p239 = scmp.lt.s32.totalorder %s20, 0
      %s240 = scalar_select %p239, %s20, 0
      %s241 = smul.addr %s240, 8
      %s242 = scalar_lea.vmem %s0, %s241
      %p243 = scmp.lt.s32.totalorder %s21, 3
      %s244 = scalar_select %p243, %s21, 3
      %s245 = smul.addr %s244, 64
      %s246 = smul.addr %s245, 4
      %s247 = scalar_lea.vmem %s2, %s246
      %p248 = scmp.lt.s32.totalorder %s20, 0
      %s249 = scalar_select %p248, %s20, 0
      %s250 = smul.addr %s249, 8
      %s251 = scalar_lea.vmem %s5, %s250
      %v253 = vld [vmem:[%s4] sm:$0xff]
      %v254 = vld [vmem:[%s4 + $0x8] sm:$0xff]
      %p255 = scmp.eq.s32.totalorder %s21, 0
      // Predicated region
      $region41: #{forward.1} parent=39 // pred_check
        %p256 = pneg %p255
      $region42: #{forward.1} parent=39 // pred_check_branch
        %258 = sbr.rel (%p256) target = $region44
      $region43: #{forward.1} parent=39 // pred_region
        %v259 = vld [vmem:[%s242] sm:$0xff]
        %v260 = vld [vmem:[%s1] sm:$0xff]
        %v261 = vld [vmem:[%s1 + $0x8] sm:$0xff]
        %v262 = vld [vmem:[%s1 + $0x10] sm:$0xff]
        %v263 = vld [vmem:[%s1 + $0x18] sm:$0xff]
        %v264 = vld [vmem:[%s1 + $0x20] sm:$0xff]
        %v265 = vld [vmem:[%s1 + $0x28] sm:$0xff]
        %v266 = vld [vmem:[%s1 + $0x30] sm:$0xff]
        %v267 = vld [vmem:[%s1 + $0x38] sm:$0xff]
        %v268 = vld [vmem:[%s1 + $0x40] sm:$0xff]
        %v269 = vld [vmem:[%s1 + $0x48] sm:$0xff]
        %v270 = vld [vmem:[%s1 + $0x50] sm:$0xff]
        %v271 = vld [vmem:[%s1 + $0x58] sm:$0xff]
        %v272 = vld [vmem:[%s1 + $0x60] sm:$0xff]
        %v273 = vld [vmem:[%s1 + $0x68] sm:$0xff]
        %v274 = vld [vmem:[%s1 + $0x70] sm:$0xff]
        %v275 = vld [vmem:[%s1 + $0x78] sm:$0xff]
        %v276 = vpack.c.bf16 %v259, %v259
        %v277 = vlaneseq
        %v278 = vshrl.u32 %v277, 7
        %v279 = vsub.s32 0, %v278
        %v280 = vrot.slane %v253, %v279
        %v281 = vlaneseq
        %v282 = vshrl.u32 %v281, 7
        %v283 = vsub.s32 0, %v282
        %v284 = vrot.slane %v254, %v283
        %v301 = vunpack.c.l.b16 %v260
        %v302 = vunpack.c.h.b16 %v260
        %v303 = vunpack.c.l.b16 %v261
        %v304 = vunpack.c.h.b16 %v261
        %v305 = vunpack.c.l.b16 %v262
        %v306 = vunpack.c.h.b16 %v262
        %v307 = vunpack.c.l.b16 %v263
        %v308 = vunpack.c.h.b16 %v263
        %v309 = vunpack.c.l.b16 %v264
        %v310 = vunpack.c.h.b16 %v264
        %v311 = vunpack.c.l.b16 %v265
        %v312 = vunpack.c.h.b16 %v265
        %v313 = vunpack.c.l.b16 %v266
        %v314 = vunpack.c.h.b16 %v266
        %v315 = vunpack.c.l.b16 %v267
        %v316 = vunpack.c.h.b16 %v267
        %v317 = vunpack.c.l.b16 %v268
        %v318 = vunpack.c.h.b16 %v268
        %v319 = vunpack.c.l.b16 %v269
        %v320 = vunpack.c.h.b16 %v269
        %v321 = vunpack.c.l.b16 %v270
        %v322 = vunpack.c.h.b16 %v270
        %v323 = vunpack.c.l.b16 %v271
        %v324 = vunpack.c.h.b16 %v271
        %v325 = vunpack.c.l.b16 %v272
        %v326 = vunpack.c.h.b16 %v272
        %v327 = vunpack.c.l.b16 %v273
        %v328 = vunpack.c.h.b16 %v273
        %v329 = vunpack.c.l.b16 %v274
        %v330 = vunpack.c.h.b16 %v274
        %v331 = vunpack.c.l.b16 %v275
        %v332 = vunpack.c.h.b16 %v275
        %v333 = vpack.c.b16 %v303, %v301
        %v334 = vpack.c.b16 %v304, %v302
        %v335 = vpack.c.b16 %v307, %v305
        %v336 = vpack.c.b16 %v308, %v306
        %v337 = vpack.c.b16 %v311, %v309
        %v338 = vpack.c.b16 %v312, %v310
        %v339 = vpack.c.b16 %v315, %v313
        %v340 = vpack.c.b16 %v316, %v314
        %v341 = vpack.c.b16 %v319, %v317
        %v342 = vpack.c.b16 %v320, %v318
        %v343 = vpack.c.b16 %v323, %v321
        %v344 = vpack.c.b16 %v324, %v322
        %v345 = vpack.c.b16 %v327, %v325
        %v346 = vpack.c.b16 %v328, %v326
        %v347 = vpack.c.b16 %v331, %v329
        %v348 = vpack.c.b16 %v332, %v330
        %365 = vmatprep.subr.bf16.mxu0 %v334
        %366 = vmatpush1.bf16.msra.mxu0 %v333
        %367 = vmatprep.subr.bf16.mxu0 %v336
        %368 = vmatpush1.bf16.msra.mxu0 %v335
        %369 = vmatprep.subr.bf16.mxu0 %v338
        %370 = vmatpush1.bf16.msra.mxu0 %v337
        %371 = vmatprep.subr.bf16.mxu0 %v340
        %372 = vmatpush1.bf16.msra.mxu0 %v339
        %373 = vmatprep.subr.bf16.mxu0 %v342
        %374 = vmatpush1.bf16.msra.mxu0 %v341
        %375 = vmatprep.subr.bf16.mxu0 %v344
        %376 = vmatpush1.bf16.msra.mxu0 %v343
        %377 = vmatprep.subr.bf16.mxu0 %v346
        %378 = vmatpush1.bf16.msra.mxu0 %v345
        %379 = vmatprep.subr.bf16.mxu0 %v348
        %380 = vmatpush1.bf16.msra.mxu0 %v347
        %381 = vmatprep.subr.bf16.mxu0 0
        %382 = vmatpush1.bf16.msra.mxu0 0
        %383 = vmatprep.subr.bf16.mxu0 0
        %384 = vmatpush1.bf16.msra.mxu0 0
        %385 = vmatprep.subr.bf16.mxu0 0
        %386 = vmatpush1.bf16.msra.mxu0 0
        %387 = vmatprep.subr.bf16.mxu0 0
        %388 = vmatpush1.bf16.msra.mxu0 0
        %389 = vmatprep.subr.bf16.mxu0 0
        %390 = vmatpush1.bf16.msra.mxu0 0
        %391 = vmatprep.subr.bf16.mxu0 0
        %392 = vmatpush1.bf16.msra.mxu0 0
        %393 = vmatprep.subr.bf16.mxu0 0
        %394 = vmatpush1.bf16.msra.mxu0 0
        %395 = vmatprep.subr.bf16.mxu0 0
        %396 = vmatpush1.bf16.msra.mxu0 0
        %397 = vmatprep.mubr.bf16.mxu0 0
        %398 = vmatmul.mubr.bf16.gmra.mrb[0].mxu0 %v276
        %v399 = vpop.f32.mrb[0].mxu0
        %v400 = vadd.f32 %v280, %v399
        %v401 = vpop.f32.mrb[0].mxu0
        %v402 = vadd.f32 %v284, %v401
        %v403 = vpop.f32.mrb[0].mxu0
        %v404 = vpop.f32.mrb[0].mxu0
        %405 = vdwg.mxu0
        %vm406 = vcmp.gt.f32.partialorder %v400, 0.0
        %vm407 = vcmp.gt.f32.partialorder %v402, 0.0
        %v408 = vmul.f32 %v400, 1.442695
        %v409 = vpow.pop %v408
        %v410 = vmul.f32 %v402, 1.442695
        %v411 = vpow.pop %v410
        %v412 = vsub.f32 %v409, 1.0
        %v413 = vsub.f32 %v411, 1.0
        %v414 = vsel %vm406, %v400, %v412
        %v415 = vsel %vm407, %v402, %v413
        %416 = vst [vmem:[#allocation2] sm:$0xff] %v414
        %417 = vst [vmem:[#allocation2 + $0x8] sm:$0xff] %v415
      $region44: #{forward.1} parent=39 // pred_fallthru
        _
      %v418 = vlaneseq
      %v419 = vshrl.u32 %v418, 7
      %s420 = sadd.s32 %s21, 1
      %v421 = vstv %s420
      %vm422 = vcmp.eq.s32.totalorder %v419, %v421
      %v423 = vsel %vm422, %v253, 0.0
      %v424 = vsel %vm422, %v254, 0.0
      %v425 = vrot.slane %v423, 4
      %v426 = vadd.f32 %v423, %v425
      %v427 = vrot.slane %v426, 2
      %v428 = vadd.f32 %v426, %v427
      %v429 = vrot.slane %v428, 1
      %v430 = vadd.f32 %v428, %v429
      %v431 = vrot.slane %v424, 4
      %v432 = vadd.f32 %v424, %v431
      %v433 = vrot.slane %v432, 2
      %v434 = vadd.f32 %v432, %v433
      %v435 = vrot.slane %v434, 1
      %v436 = vadd.f32 %v434, %v435
      %v437 = vld [vmem:[#allocation2] sm:$0xff]
      %v438 = vld [vmem:[#allocation2 + $0x8] sm:$0xff]
      %v439 = vld [vmem:[%s247] sm:$0xff]
      %v440 = vld [vmem:[%s247 + $0x8] sm:$0xff]
      %v441 = vld [vmem:[%s247 + $0x10] sm:$0xff]
      %v442 = vld [vmem:[%s247 + $0x18] sm:$0xff]
      %v443 = vld [vmem:[%s247 + $0x20] sm:$0xff]
      %v444 = vld [vmem:[%s247 + $0x28] sm:$0xff]
      %v445 = vld [vmem:[%s247 + $0x30] sm:$0xff]
      %v446 = vld [vmem:[%s247 + $0x38] sm:$0xff]
      %v447 = vld [vmem:[%s247 + $0x40] sm:$0xff]
      %v448 = vld [vmem:[%s247 + $0x48] sm:$0xff]
      %v449 = vld [vmem:[%s247 + $0x50] sm:$0xff]
      %v450 = vld [vmem:[%s247 + $0x58] sm:$0xff]
      %v451 = vld [vmem:[%s247 + $0x60] sm:$0xff]
      %v452 = vld [vmem:[%s247 + $0x68] sm:$0xff]
      %v453 = vld [vmem:[%s247 + $0x70] sm:$0xff]
      %v454 = vld [vmem:[%s247 + $0x78] sm:$0xff]
      %v455 = vld [vmem:[%s247 + $0x80] sm:$0xff]
      %v456 = vld [vmem:[%s247 + $0x88] sm:$0xff]
      %v457 = vld [vmem:[%s247 + $0x90] sm:$0xff]
      %v458 = vld [vmem:[%s247 + $0x98] sm:$0xff]
      %v459 = vld [vmem:[%s247 + $0xa0] sm:$0xff]
      %v460 = vld [vmem:[%s247 + $0xa8] sm:$0xff]
      %v461 = vld [vmem:[%s247 + $0xb0] sm:$0xff]
      %v462 = vld [vmem:[%s247 + $0xb8] sm:$0xff]
      %v463 = vld [vmem:[%s247 + $0xc0] sm:$0xff]
      %v464 = vld [vmem:[%s247 + $0xc8] sm:$0xff]
      %v465 = vld [vmem:[%s247 + $0xd0] sm:$0xff]
      %v466 = vld [vmem:[%s247 + $0xd8] sm:$0xff]
      %v467 = vld [vmem:[%s247 + $0xe0] sm:$0xff]
      %v468 = vld [vmem:[%s247 + $0xe8] sm:$0xff]
      %v469 = vld [vmem:[%s247 + $0xf0] sm:$0xff]
      %v470 = vld [vmem:[%s247 + $0xf8] sm:$0xff]
      %v471 = vpack.c.bf16 %v437, %v437
      %v472 = vpack.c.bf16 %v438, %v438
      %v505 = vunpack.c.l.b16 %v439
      %v506 = vunpack.c.h.b16 %v439
      %v507 = vunpack.c.l.b16 %v440
      %v508 = vunpack.c.h.b16 %v440
      %v509 = vunpack.c.l.b16 %v441
      %v510 = vunpack.c.h.b16 %v441
      %v511 = vunpack.c.l.b16 %v442
      %v512 = vunpack.c.h.b16 %v442
      %v513 = vunpack.c.l.b16 %v443
      %v514 = vunpack.c.h.b16 %v443
      %v515 = vunpack.c.l.b16 %v444
      %v516 = vunpack.c.h.b16 %v444
      %v517 = vunpack.c.l.b16 %v445
      %v518 = vunpack.c.h.b16 %v445
      %v519 = vunpack.c.l.b16 %v446
      %v520 = vunpack.c.h.b16 %v446
      %v521 = vunpack.c.l.b16 %v447
      %v522 = vunpack.c.h.b16 %v447
      %v523 = vunpack.c.l.b16 %v448
      %v524 = vunpack.c.h.b16 %v448
      %v525 = vunpack.c.l.b16 %v449
      %v526 = vunpack.c.h.b16 %v449
      %v527 = vunpack.c.l.b16 %v450
      %v528 = vunpack.c.h.b16 %v450
      %v529 = vunpack.c.l.b16 %v451
      %v530 = vunpack.c.h.b16 %v451
      %v531 = vunpack.c.l.b16 %v452
      %v532 = vunpack.c.h.b16 %v452
      %v533 = vunpack.c.l.b16 %v453
      %v534 = vunpack.c.h.b16 %v453
      %v535 = vunpack.c.l.b16 %v454
      %v536 = vunpack.c.h.b16 %v454
      %v537 = vunpack.c.l.b16 %v455
      %v538 = vunpack.c.h.b16 %v455
      %v539 = vunpack.c.l.b16 %v456
      %v540 = vunpack.c.h.b16 %v456
      %v541 = vunpack.c.l.b16 %v457
      %v542 = vunpack.c.h.b16 %v457
      %v543 = vunpack.c.l.b16 %v458
      %v544 = vunpack.c.h.b16 %v458
      %v545 = vunpack.c.l.b16 %v459
      %v546 = vunpack.c.h.b16 %v459
      %v547 = vunpack.c.l.b16 %v460
      %v548 = vunpack.c.h.b16 %v460
      %v549 = vunpack.c.l.b16 %v461
      %v550 = vunpack.c.h.b16 %v461
      %v551 = vunpack.c.l.b16 %v462
      %v552 = vunpack.c.h.b16 %v462
      %v553 = vunpack.c.l.b16 %v463
      %v554 = vunpack.c.h.b16 %v463
      %v555 = vunpack.c.l.b16 %v464
      %v556 = vunpack.c.h.b16 %v464
      %v557 = vunpack.c.l.b16 %v465
      %v558 = vunpack.c.h.b16 %v465
      %v559 = vunpack.c.l.b16 %v466
      %v560 = vunpack.c.h.b16 %v466
      %v561 = vunpack.c.l.b16 %v467
      %v562 = vunpack.c.h.b16 %v467
      %v563 = vunpack.c.l.b16 %v468
      %v564 = vunpack.c.h.b16 %v468
      %v565 = vunpack.c.l.b16 %v469
      %v566 = vunpack.c.h.b16 %v469
      %v567 = vunpack.c.l.b16 %v470
      %v568 = vunpack.c.h.b16 %v470
      %v569 = vpack.c.b16 %v507, %v505
      %v570 = vpack.c.b16 %v508, %v506
      %v571 = vpack.c.b16 %v511, %v509
      %v572 = vpack.c.b16 %v512, %v510
      %v573 = vpack.c.b16 %v515, %v513
      %v574 = vpack.c.b16 %v516, %v514
      %v575 = vpack.c.b16 %v519, %v517
      %v576 = vpack.c.b16 %v520, %v518
      %v577 = vpack.c.b16 %v523, %v521
      %v578 = vpack.c.b16 %v524, %v522
      %v579 = vpack.c.b16 %v527, %v525
      %v580 = vpack.c.b16 %v528, %v526
      %v581 = vpack.c.b16 %v531, %v529
      %v582 = vpack.c.b16 %v532, %v530
      %v583 = vpack.c.b16 %v535, %v533
      %v584 = vpack.c.b16 %v536, %v534
      %v585 = vpack.c.b16 %v539, %v537
      %v586 = vpack.c.b16 %v540, %v538
      %v587 = vpack.c.b16 %v543, %v541
      %v588 = vpack.c.b16 %v544, %v542
      %v589 = vpack.c.b16 %v547, %v545
      %v590 = vpack.c.b16 %v548, %v546
      %v591 = vpack.c.b16 %v551, %v549
      %v592 = vpack.c.b16 %v552, %v550
      %v593 = vpack.c.b16 %v555, %v553
      %v594 = vpack.c.b16 %v556, %v554
      %v595 = vpack.c.b16 %v559, %v557
      %v596 = vpack.c.b16 %v560, %v558
      %v597 = vpack.c.b16 %v563, %v561
      %v598 = vpack.c.b16 %v564, %v562
      %v599 = vpack.c.b16 %v567, %v565
      %v600 = vpack.c.b16 %v568, %v566
      %633 = vmatprep.subr.bf16.mxu0 %v570
      %634 = vmatpush1.bf16.msra.mxu0 %v569
      %635 = vmatprep.subr.bf16.mxu0 %v572
      %636 = vmatpush1.bf16.msra.mxu0 %v571
      %637 = vmatprep.subr.bf16.mxu0 %v574
      %638 = vmatpush1.bf16.msra.mxu0 %v573
      %639 = vmatprep.subr.bf16.mxu0 %v576
      %640 = vmatpush1.bf16.msra.mxu0 %v575
      %641 = vmatprep.subr.bf16.mxu0 %v578
      %642 = vmatpush1.bf16.msra.mxu0 %v577
      %643 = vmatprep.subr.bf16.mxu0 %v580
      %644 = vmatpush1.bf16.msra.mxu0 %v579
      %645 = vmatprep.subr.bf16.mxu0 %v582
      %646 = vmatpush1.bf16.msra.mxu0 %v581
      %647 = vmatprep.subr.bf16.mxu0 %v584
      %648 = vmatpush1.bf16.msra.mxu0 %v583
      %649 = vmatprep.subr.bf16.mxu0 %v586
      %650 = vmatpush1.bf16.msra.mxu0 %v585
      %651 = vmatprep.subr.bf16.mxu0 %v588
      %652 = vmatpush1.bf16.msra.mxu0 %v587
      %653 = vmatprep.subr.bf16.mxu0 %v590
      %654 = vmatpush1.bf16.msra.mxu0 %v589
      %655 = vmatprep.subr.bf16.mxu0 %v592
      %656 = vmatpush1.bf16.msra.mxu0 %v591
      %657 = vmatprep.subr.bf16.mxu0 %v594
      %658 = vmatpush1.bf16.msra.mxu0 %v593
      %659 = vmatprep.subr.bf16.mxu0 %v596
      %660 = vmatpush1.bf16.msra.mxu0 %v595
      %661 = vmatprep.subr.bf16.mxu0 %v598
      %662 = vmatpush1.bf16.msra.mxu0 %v597
      %663 = vmatprep.subr.bf16.mxu0 %v600
      %664 = vmatpush1.bf16.msra.mxu0 %v599
      %665 = vmatprep.mubr.bf16.mxu0 %v472
      %666 = vmatmul.mubr.bf16.gmra.mrb[0].mxu0 %v471
      %v667 = vpop.f32.mrb[0].mxu0
      %v668 = vadd.f32 %v430, %v667
      %v669 = vpop.f32.mrb[0].mxu0
      %v670 = vadd.f32 %v436, %v669
      %v671 = vpop.f32.mrb[0].mxu0
      %v672 = vpop.f32.mrb[0].mxu0
      %673 = vdwg.mxu0
      %vm674 = vcmp.gt.f32.partialorder %v668, 0.0
      %vm675 = vcmp.gt.f32.partialorder %v670, 0.0
      %v676 = vmul.f32 %v668, 1.442695
      %v677 = vpow.pop %v676
      %v678 = vmul.f32 %v670, 1.442695
      %v679 = vpow.pop %v678
      %v680 = vsub.f32 %v677, 1.0
      %v681 = vsub.f32 %v679, 1.0
      %v682 = vsel %vm674, %v668, %v680
      %v683 = vsel %vm675, %v670, %v681
      %684 = vst [vmem:[#allocation2] sm:$0xff] %v682
      %685 = vst [vmem:[#allocation2 + $0x8] sm:$0xff] %v683
      %p686 = scmp.eq.s32.totalorder %s21, 3
      // Predicated region
      $region45: #{forward.1} parent=39 // pred_check
        %p687 = pneg %p686
      $region46: #{forward.1} parent=39 // pred_check_branch
        %689 = sbr.rel (%p687) target = $region48
      $region47: #{forward.1} parent=39 // pred_region
        %v690 = vld [vmem:[#allocation2] sm:$0xff]
        %v691 = vld [vmem:[#allocation2 + $0x8] sm:$0xff]
        %v692 = vld [vmem:[%s3] sm:$0xf]
        %v693 = vld [vmem:[%s3 + $0x4] sm:$0xf]
        %v694 = vld [vmem:[%s3 + $0x8] sm:$0xf]
        %v695 = vld [vmem:[%s3 + $0xc] sm:$0xf]
        %v696 = vld [vmem:[%s3 + $0x10] sm:$0xf]
        %v697 = vld [vmem:[%s3 + $0x14] sm:$0xf]
        %v698 = vld [vmem:[%s3 + $0x18] sm:$0xf]
        %v699 = vld [vmem:[%s3 + $0x1c] sm:$0xf]
        %v700 = vld [vmem:[%s3 + $0x20] sm:$0xf]
        %v701 = vld [vmem:[%s3 + $0x24] sm:$0xf]
        %v702 = vld [vmem:[%s3 + $0x28] sm:$0xf]
        %v703 = vld [vmem:[%s3 + $0x2c] sm:$0xf]
        %v704 = vld [vmem:[%s3 + $0x30] sm:$0xf]
        %v705 = vld [vmem:[%s3 + $0x34] sm:$0xf]
        %v706 = vld [vmem:[%s3 + $0x38] sm:$0xf]
        %v707 = vld [vmem:[%s3 + $0x3c] sm:$0xf]
        %v708 = vld [vmem:[%s3 + $0x40] sm:$0xf]
        %v709 = vld [vmem:[%s3 + $0x44] sm:$0xf]
        %v710 = vld [vmem:[%s3 + $0x48] sm:$0xf]
        %v711 = vld [vmem:[%s3 + $0x4c] sm:$0xf]
        %v712 = vld [vmem:[%s3 + $0x50] sm:$0xf]
        %v713 = vld [vmem:[%s3 + $0x54] sm:$0xf]
        %v714 = vld [vmem:[%s3 + $0x58] sm:$0xf]
        %v715 = vld [vmem:[%s3 + $0x5c] sm:$0xf]
        %v716 = vld [vmem:[%s3 + $0x60] sm:$0xf]
        %v717 = vld [vmem:[%s3 + $0x64] sm:$0xf]
        %v718 = vld [vmem:[%s3 + $0x68] sm:$0xf]
        %v719 = vld [vmem:[%s3 + $0x6c] sm:$0xf]
        %v720 = vld [vmem:[%s3 + $0x70] sm:$0xf]
        %v721 = vld [vmem:[%s3 + $0x74] sm:$0xf]
        %v722 = vld [vmem:[%s3 + $0x78] sm:$0xf]
        %v723 = vld [vmem:[%s3 + $0x7c] sm:$0xf]
        %v724 = vpack.c.bf16 %v690, %v690
        %v725 = vpack.c.bf16 %v691, %v691
        %v726 = vlaneseq
        %v727 = vshrl.u32 %v726, 7
        %v728 = vsub.s32 5, %v727
        %v729 = vrot.slane %v253, %v728
        %v762 = vunpack.c.l.b16 %v692
        %v763 = vunpack.c.l.b16 %v693
        %v764 = vunpack.c.l.b16 %v694
        %v765 = vunpack.c.l.b16 %v695
        %v766 = vunpack.c.l.b16 %v696
        %v767 = vunpack.c.l.b16 %v697
        %v768 = vunpack.c.l.b16 %v698
        %v769 = vunpack.c.l.b16 %v699
        %v770 = vunpack.c.l.b16 %v700
        %v771 = vunpack.c.l.b16 %v701
        %v772 = vunpack.c.l.b16 %v702
        %v773 = vunpack.c.l.b16 %v703
        %v774 = vunpack.c.l.b16 %v704
        %v775 = vunpack.c.l.b16 %v705
        %v776 = vunpack.c.l.b16 %v706
        %v777 = vunpack.c.l.b16 %v707
        %v778 = vunpack.c.l.b16 %v708
        %v779 = vunpack.c.l.b16 %v709
        %v780 = vunpack.c.l.b16 %v710
        %v781 = vunpack.c.l.b16 %v711
        %v782 = vunpack.c.l.b16 %v712
        %v783 = vunpack.c.l.b16 %v713
        %v784 = vunpack.c.l.b16 %v714
        %v785 = vunpack.c.l.b16 %v715
        %v786 = vunpack.c.l.b16 %v716
        %v787 = vunpack.c.l.b16 %v717
        %v788 = vunpack.c.l.b16 %v718
        %v789 = vunpack.c.l.b16 %v719
        %v790 = vunpack.c.l.b16 %v720
        %v791 = vunpack.c.l.b16 %v721
        %v792 = vunpack.c.l.b16 %v722
        %v793 = vunpack.c.l.b16 %v723
        %v794 = vpack.c.b16 %v763, %v762
        %v795 = vpack.c.b16 %v765, %v764
        %v796 = vpack.c.b16 %v767, %v766
        %v797 = vpack.c.b16 %v769, %v768
        %v798 = vpack.c.b16 %v771, %v770
        %v799 = vpack.c.b16 %v773, %v772
        %v800 = vpack.c.b16 %v775, %v774
        %v801 = vpack.c.b16 %v777, %v776
        %v802 = vpack.c.b16 %v779, %v778
        %v803 = vpack.c.b16 %v781, %v780
        %v804 = vpack.c.b16 %v783, %v782
        %v805 = vpack.c.b16 %v785, %v784
        %v806 = vpack.c.b16 %v787, %v786
        %v807 = vpack.c.b16 %v789, %v788
        %v808 = vpack.c.b16 %v791, %v790
        %v809 = vpack.c.b16 %v793, %v792
        %826 = vmatprep.subr.bf16.mxu0 0
        %827 = vmatpush1.bf16.msra.mxu0 %v794
        %828 = vmatprep.subr.bf16.mxu0 0
        %829 = vmatpush1.bf16.msra.mxu0 %v795
        %830 = vmatprep.subr.bf16.mxu0 0
        %831 = vmatpush1.bf16.msra.mxu0 %v796
        %832 = vmatprep.subr.bf16.mxu0 0
        %833 = vmatpush1.bf16.msra.mxu0 %v797
        %834 = vmatprep.subr.bf16.mxu0 0
        %835 = vmatpush1.bf16.msra.mxu0 %v798
        %836 = vmatprep.subr.bf16.mxu0 0
        %837 = vmatpush1.bf16.msra.mxu0 %v799
        %838 = vmatprep.subr.bf16.mxu0 0
        %839 = vmatpush1.bf16.msra.mxu0 %v800
        %840 = vmatprep.subr.bf16.mxu0 0
        %841 = vmatpush1.bf16.msra.mxu0 %v801
        %842 = vmatprep.subr.bf16.mxu0 0
        %843 = vmatpush1.bf16.msra.mxu0 %v802
        %844 = vmatprep.subr.bf16.mxu0 0
        %845 = vmatpush1.bf16.msra.mxu0 %v803
        %846 = vmatprep.subr.bf16.mxu0 0
        %847 = vmatpush1.bf16.msra.mxu0 %v804
        %848 = vmatprep.subr.bf16.mxu0 0
        %849 = vmatpush1.bf16.msra.mxu0 %v805
        %850 = vmatprep.subr.bf16.mxu0 0
        %851 = vmatpush1.bf16.msra.mxu0 %v806
        %852 = vmatprep.subr.bf16.mxu0 0
        %853 = vmatpush1.bf16.msra.mxu0 %v807
        %854 = vmatprep.subr.bf16.mxu0 0
        %855 = vmatpush1.bf16.msra.mxu0 %v808
        %856 = vmatprep.subr.bf16.mxu0 0
        %857 = vmatpush1.bf16.msra.mxu0 %v809
        %858 = vmatprep.mubr.bf16.mxu0 %v725
        %859 = vmatmul.mubr.bf16.gmra.mrb[0].mxu0 %v724
        %v860 = vpop.f32.mrb[0].mxu0
        %v861 = vadd.f32 %v729, %v860
        %v862 = vpop.f32.mrb[0].mxu0
        %v863 = vpop.f32.mrb[0].mxu0
        %v864 = vpop.f32.mrb[0].mxu0
        %865 = vdwg.mxu0
        %v866 = vtanh.pop %v861
        %867 = vst [vmem:[%s251] sm:$0xff] %v866
      $region48: #{forward.1} parent=39 // pred_fallthru
        _
      %p868 = scmp.lt.s32.totalorder %s20, 0
      %s869 = scalar_select %p868, %s20, 0
      %s870 = smul.addr %s869, 8
      %s871 = scalar_lea.vmem %s5, %s870
      // Predicated region
      $region49: #{forward.1} parent=39 // pred_check
        %p872 = pneg %p161
      $region50: #{forward.1} parent=39 // pred_check_branch
        %874 = sbr.rel (%p872) target = $region52
      $region51: #{forward.1} parent=39 // pred_region
        _
      $region52: #{forward.1} parent=39 // pred_fallthru
        _
      // Predicated region
      $region53: #{forward.1} parent=39 // pred_check
        %p875 = pneg %p161
      $region54: #{forward.1} parent=39 // pred_check_branch
        %877 = sbr.rel (%p875) target = $region56
      $region55: #{forward.1} parent=39 // pred_region
        %p878 = scmp.lt.s32.totalorder %s20, 0
        %s879 = scalar_select %p878, %s20, 0
        %s880 = smul.addr %s879, 8
        %s881 = scalar_lea.vmem %s5, %s880
      $region56: #{forward.1} parent=39 // pred_fallthru
        _
    $region40: #{forward.1} parent=5 // pred_fallthru
      _
    %p882 = scmp.le.s32.totalorder 2, %s11
    // Predicated region
    $region57: #{forward.1} parent=5 // pred_check
      %p883 = pneg %p882
    $region58: #{forward.1} parent=5 // pred_check_branch
      %885 = sbr.rel (%p883) target = $region60
    $region59: #{forward.1} parent=5 // pred_region
      %s886 = ssub.s32 %s11, 2
    $region60: #{forward.1} parent=5 // pred_fallthru
      _
  $region6: #{forward.1} parent=0 // loop_footer
    %s15 = sadd.s32 1, %s11
  $region7: #{forward.1} parent=0 // loop_footer_branch
    %10 = sbr.rel target = $region3
  $region8: #{forward.1} parent=0 // loop_exit
    _

</llo_original>
